<compile_context>
chip_gen: v7x
topology: tpu7x:2x2x1
jax: 0.10.0
libtpu: 0.0.40
codegen_flags: <defaults>
</compile_context>

<pallas_src>
import math

import jax
import jax.numpy as jnp
from jax.experimental import pallas as pl
from jax.experimental.pallas import tpu as pltpu


def _round_up(a, b):
    return (a + b - 1) // b * b


def _plan_dim(size, tile, align):
    """Effective tile (<= requested, aligned) and padded size divisible by it."""
    t = min(tile, _round_up(size, align))
    return t, _round_up(size, t)


def _vmem_limit_bytes(tm, tn, tk, rt, in_itemsize, out_itemsize):
    """Double-buffered IO tiles + f32 accumulator, with 2x slack, capped at
    64 MiB (v7x physical VMEM); floor at the 32 MiB scoped default."""
    per_step = ((tm * tk + tk * tn + tm * rt + rt * tn) * in_itemsize
                + tn * 4 + tm * tn * out_itemsize)
    budget = 2 * per_step + tm * tn * 4
    return int(min(64 << 20, max(32 << 20, 2 * budget)))


# -----------------------------------------------------------------------------
# Pallas kernel: tiled pretrained matmul; LoRA rank-r epilogue only
# -----------------------------------------------------------------------------
def _lora_qkv_kernel(x_ref, wt_ref, bias_ref, aft_ref, bft_ref, o_ref, acc_ref):
    k = pl.program_id(2)

    @pl.when(k == 0)
    def _init():
        acc_ref[...] = jnp.zeros_like(acc_ref)

    # pretrained partial: x @ W^T, with W^T streamed as (tk, tn) slabs.
    acc_ref[...] += jnp.dot(x_ref[...], wt_ref[...],
                            preferred_element_type=jnp.float32)

    @pl.when(k == pl.num_programs(2) - 1)
    def _finalize():
        # B_full^T already carries the alpha/r scaling (folded in the wrapper);
        # after_A was precomputed outside the grid, so the LoRA cost here is a
        # single (tm, Rt_pad) @ (Rt_pad, tn) dot per output tile.
        lora = jnp.dot(aft_ref[...], bft_ref[...],
                       preferred_element_type=jnp.float32)
        o_ref[...] = (acc_ref[...] + lora + bias_ref[...]).astype(o_ref.dtype)


# -----------------------------------------------------------------------------
# One-time parameter preparation (OUTSIDE the per-call path): transpose weights,
# fold alpha/r scaling into B_full, pad N/K to 128-aligned tiles and the LoRA
# rank to 128 lanes, optional bf16 cast.
# -----------------------------------------------------------------------------
def prepare_params(w, bias, lora_A, b_full, scaling, *, tn=512, tk=512,
                   compute_dtype=jnp.float32, out_dtype=None):
    assert tn % 128 == 0 and tk % 128 == 0
    N, K = w.shape
    Rt = lora_A.shape[0]
    Rt_pad = _round_up(Rt, 128)          # lane-dense rank dim; zeros are inert
    tn_eff, N_pad = _plan_dim(N, tn, 128)
    tk_eff, K_pad = _plan_dim(K, tk, 128)

    wt = jnp.zeros((K_pad, N_pad), compute_dtype).at[:K, :N].set(
        w.T.astype(compute_dtype))
    # A pre-transposed to (K_pad, Rt_pad): natural (contract, out) layout for
    # the wrapper-side after_A matmul.
    at = jnp.zeros((K_pad, Rt_pad), compute_dtype).at[:K, :Rt].set(
        lora_A.T.astype(compute_dtype))
    bft = jnp.zeros((Rt_pad, N_pad), compute_dtype).at[:Rt, :N].set(
        (b_full.T * scaling).astype(compute_dtype))
    bias2d = jnp.zeros((1, N_pad), jnp.float32).at[:, :N].set(
        bias.astype(jnp.float32).reshape(1, N))
    return dict(wt=wt, at=at, bft=bft, bias2d=bias2d, N=N, K=K, Rt_pad=Rt_pad,
                tn=tn_eff, tk=tk_eff, compute_dtype=compute_dtype,
                out_dtype=(compute_dtype if out_dtype is None else out_dtype))


# -----------------------------------------------------------------------------
# Forward wrapper: (B, T, in_features) -> (B, T, out_features)
# -----------------------------------------------------------------------------
def lora_qkv_forward(x, p, *, tm=256):
    assert tm % 8 == 0
    B, T, K = x.shape
    assert K == p["K"]
    N = p["N"]
    M = B * T
    tn_eff, tk_eff = p["tn"], p["tk"]
    K_pad, N_pad = p["wt"].shape
    Rt_pad = p["Rt_pad"]
    cdt = p["compute_dtype"]
    odt = p["out_dtype"]
    tm_eff, M_pad = _plan_dim(M, tm, 8)

    # Flatten tokens; cast is a no-op in the f32 path, one pass in bf16.
    # TODO(synk): for a fully fused path, pre-cast x upstream / use
    # allow_input_fusion so the reshape+cast fuse into the pallas_call.
    x_flat = x.reshape(M, K).astype(cdt)
    if (M_pad, K_pad) != (M, K):
        x_flat = jnp.pad(x_flat, ((0, M_pad - M), (0, K_pad - K)))

    # LoRA A-path hoisted out of the grid: tiny rank-r matmul, f32 accumulate.
    after_a = jnp.dot(x_flat, p["at"],
                      preferred_element_type=jnp.float32).astype(cdt)

    grid = (M_pad // tm_eff, N_pad // tn_eff, K_pad // tk_eff)
    vmem_limit = _vmem_limit_bytes(tm_eff, tn_eff, tk_eff, Rt_pad,
                                   jnp.dtype(cdt).itemsize,
                                   jnp.dtype(odt).itemsize)

    out_flat = pl.pallas_call(
        _lora_qkv_kernel,
        out_shape=jax.ShapeDtypeStruct((M_pad, N_pad), odt),
        grid_spec=pltpu.PrefetchScalarGridSpec(
            num_scalar_prefetch=0,
            grid=grid,
            in_specs=[
                pl.BlockSpec((tm_eff, tk_eff), lambda i, j, k: (i, k)),   # x
                # NOTE: if the W^T DMA stream is still exposed (small M /
                # decode), pipeline_mode=pl.Buffered(3) here hides more HBM
                # latency at the cost of one extra wt slab of VMEM.
                pl.BlockSpec((tk_eff, tn_eff), lambda i, j, k: (k, j)),   # W^T
                pl.BlockSpec((1, tn_eff), lambda i, j, k: (0, j)),        # bias
                pl.BlockSpec((tm_eff, Rt_pad), lambda i, j, k: (i, 0)),   # after_A
                pl.BlockSpec((Rt_pad, tn_eff), lambda i, j, k: (0, j)),   # B_full^T*s
            ],
            out_specs=pl.BlockSpec((tm_eff, tn_eff), lambda i, j, k: (i, j)),
            scratch_shapes=[
                pltpu.VMEM((tm_eff, tn_eff), jnp.float32),   # pretrained acc
            ]),
        compiler_params=pltpu.CompilerParams(
            dimension_semantics=("parallel", "parallel", "arbitrary"),
            vmem_limit_bytes=vmem_limit),
    )(x_flat, p["wt"], p["bias2d"], after_a, p["bft"])
    return out_flat[:M, :N].reshape(B, T, N)


# -----------------------------------------------------------------------------
# Parameter setup mirroring LoRAQKVLinear.__init__
# -----------------------------------------------------------------------------
def build_params(key, in_features, out_features, n_head, n_query_groups,
                 r, lora_alpha, enable_lora):
    enable_q, enable_k, enable_v = enable_lora
    n_enabled = sum(enable_lora)
    kv_embd_size = in_features // (n_head // n_query_groups)
    qkv_shapes = [s for s in (in_features * enable_q,
                              kv_embd_size * enable_k,
                              kv_embd_size * enable_v) if s]

    k1, k2, k3, k4 = jax.random.split(key, 4)
    bound = 1.0 / math.sqrt(in_features)
    w = jax.random.uniform(k1, (out_features, in_features), jnp.float32,
                           -bound, bound)
    bias = jax.random.uniform(k2, (out_features,), jnp.float32, -bound, bound)
    lora_A = jax.random.uniform(k3, (r * n_enabled, in_features), jnp.float32,
                                -bound, bound)
    # LoRA B is zeros in the original init; use small random values so the
    # LoRA branch is exercised non-trivially (deterministic, in-script).
    lora_B = 0.02 * jax.random.normal(k4, (sum(qkv_shapes), r), jnp.float32)

    lora_ind = []
    if enable_q:
        lora_ind.extend(range(0, in_features))
    if enable_k:
        lora_ind.extend(range(in_features, in_features + kv_embd_size))
    if enable_v:
        lora_ind.extend(range(in_features + kv_embd_size, out_features))

    # Fold conv1d(groups)/split + zero_pad into one dense block-diagonal matrix.
    b_full = jnp.zeros((out_features, r * n_enabled), jnp.float32)
    row_off = 0
    for part, s in enumerate(qkv_shapes):
        rows = jnp.asarray(lora_ind[row_off:row_off + s], jnp.int32)
        b_full = b_full.at[rows, part * r:(part + 1) * r].set(
            lora_B[row_off:row_off + s, :])
        row_off += s

    scaling = lora_alpha / r
    return dict(w=w, bias=bias, lora_A=lora_A, lora_B=lora_B, b_full=b_full,
                scaling=scaling, qkv_shapes=qkv_shapes, lora_ind=lora_ind)


# -----------------------------------------------------------------------------
# Pure-JAX reference mirroring the torch forward (split / conv1d / zero_pad)
# -----------------------------------------------------------------------------
def reference_forward(x, p, r, out_features):
    pretrained = jnp.einsum("btk,nk->btn", x, p["w"]) + p["bias"]
    after_A = jnp.einsum("btk,nk->btn", x, p["lora_A"])
    parts = []
    row_off = 0
    for i, s in enumerate(p["qkv_shapes"]):
        a_part = after_A[..., i * r:(i + 1) * r]
        b_part = p["lora_B"][row_off:row_off + s, :]
        parts.append(jnp.einsum("btr,sr->bts", a_part, b_part))
        row_off += s
    after_B = jnp.concatenate(parts, axis=-1)
    padded = jnp.zeros(after_B.shape[:-1] + (out_features,), after_B.dtype)
    padded = padded.at[..., jnp.asarray(p["lora_ind"], jnp.int32)].set(after_B)
    return pretrained + padded * p["scaling"]


def run_case(key, *, in_features, n_head, n_query_groups, r, lora_alpha,
             enable_lora, batch, seq, compute_dtype, tiles, atol, rtol, name):
    kv_embd_size = in_features // (n_head // n_query_groups)
    out_features = in_features + 2 * kv_embd_size
    kp, kx = jax.random.split(key)
    params = build_params(kp, in_features, out_features, n_head,
                          n_query_groups, r, lora_alpha, enable_lora)
    prepared = prepare_params(params["w"], params["bias"], params["lora_A"],
                              params["b_full"], params["scaling"],
                              tn=tiles["tn"], tk=tiles["tk"],
                              compute_dtype=compute_dtype)
    x = jax.random.normal(kx, (batch, seq, in_features), jnp.float32)

    out = lora_qkv_forward(x, prepared, tm=tiles["tm"])
    out = jax.block_until_ready(out)

    ref = reference_forward(x, params, r, out_features)
    assert out.shape == (batch, seq, out_features), name
    assert jnp.allclose(out.astype(jnp.float32), ref, atol=atol,
                        rtol=rtol), f"mismatch ({name})"


if __name__ == "__main__":
    key = jax.random.PRNGKey(0)
    k1, k2, k3 = jax.random.split(key, 3)

    # 1) Toy config from the module doc; f32; production default tiles
    #    (shapes smaller than the tiles -> single grid step); tight tolerance.
    run_case(k1, in_features=32, n_head=4, n_query_groups=2, r=4, lora_alpha=8,
             enable_lora=(True, False, True), batch=2, seq=8,
             compute_dtype=jnp.float32,
             tiles=dict(tm=256, tn=512, tk=512), atol=2e-4, rtol=2e-4,
             name="toy_f32")

    # 2) Grid-coverage config (small tiles on purpose, not a perf config):
    #    exercises >1 tile on every grid axis, K-axis accumulation and the
    #    pl.when init/finalize epilogue.
    run_case(k2, in_features=256, n_head=4, n_query_groups=2, r=4, lora_alpha=8,
             enable_lora=(True, False, True), batch=2, seq=128,
             compute_dtype=jnp.float32,
             tiles=dict(tm=128, tn=256, tk=128), atol=2e-4, rtol=2e-4,
             name="grid_f32")

    # 3) bf16 end-to-end with production-style tiles (tm=256, tn=512, tk=512):
    #    bf16 weights/activations/output halve HBM traffic; accumulation stays
    #    f32; exercises the padded-N (masked output columns) path.
    run_case(k3, in_features=512, n_head=8, n_query_groups=2, r=4, lora_alpha=8,
             enable_lora=(True, False, True), batch=2, seq=256,
             compute_dtype=jnp.bfloat16,
             tiles=dict(tm=256, tn=512, tk=512), atol=5e-2, rtol=5e-2,
             name="grid_bf16")

    # TODO(synk): lora_dropout > 0 (training-mode dropout) is not modeled; the
    # module defaults to identity for p=0.0, which is what this kernel does.
    print("KERNEL_OK")
</pallas_src>

<mosaic_0001>
module attributes {stable_mosaic.version = 11 : i64} {
  func.func @_lora_qkv_kernel(%arg0: i32, %arg1: i32, %arg2: i32, %arg3: memref<16x128xf32, #tpu.memory_space<vmem>>, %arg4: memref<128x128xf32, #tpu.memory_space<vmem>>, %arg5: memref<1x128xf32, #tpu.memory_space<vmem>>, %arg6: memref<16x128xf32, #tpu.memory_space<vmem>>, %arg7: memref<128x128xf32, #tpu.memory_space<vmem>>, %arg8: memref<16x128xf32, #tpu.memory_space<vmem>>, %arg9: memref<16x128xf32, #tpu.memory_space<vmem>>) attributes {dimension_semantics = [#tpu.dimension_semantics<parallel>, #tpu.dimension_semantics<parallel>, #tpu.dimension_semantics<arbitrary>], iteration_bounds = array<i64: 1, 1, 1>, scalar_prefetch = 0 : i64, scratch_operands = 1 : i64, tpu.core_type = #tpu.core_type<tc>, window_params = [{transform_indices = @transform_0, window_bounds = array<i64: 16, 128>}, {transform_indices = @transform_1, window_bounds = array<i64: 128, 128>}, {transform_indices = @transform_2, window_bounds = array<i64: 1, 128>}, {transform_indices = @transform_3, window_bounds = array<i64: 16, 128>}, {transform_indices = @transform_4, window_bounds = array<i64: 128, 128>}, {transform_indices = @transform_5, window_bounds = array<i64: 16, 128>}]} {
    %c0_i32 = arith.constant 0 : i32
    %0 = arith.cmpi eq, %arg2, %c0_i32 : i32
    %1 = arith.extui %0 : i1 to i32
    %c0_i32_0 = arith.constant 0 : i32
    %2 = arith.cmpi ne, %1, %c0_i32_0 : i32
    scf.if %2 {
      %cst_10 = arith.constant 0.000000e+00 : f32
      %12 = vector.broadcast %cst_10 : f32 to vector<16x128xf32>
      %c0_11 = arith.constant 0 : index
      %c0_12 = arith.constant 0 : index
      %13 = vector.load %arg9[%c0_11, %c0_12] : memref<16x128xf32, #tpu.memory_space<vmem>>, vector<16x128xf32>
      tpu.vector_store %arg9[%c0_11, %c0_12], %12 {strides = array<i32>} : memref<16x128xf32, #tpu.memory_space<vmem>>, vector<16x128xf32>,
    } else {
    }
    %c0 = arith.constant 0 : index
    %c0_1 = arith.constant 0 : index
    %3 = vector.load %arg9[%c0, %c0_1] : memref<16x128xf32, #tpu.memory_space<vmem>>, vector<16x128xf32>
    %c0_2 = arith.constant 0 : index
    %c0_3 = arith.constant 0 : index
    %4 = vector.load %arg3[%c0_2, %c0_3] : memref<16x128xf32, #tpu.memory_space<vmem>>, vector<16x128xf32>
    %c0_4 = arith.constant 0 : index
    %c0_5 = arith.constant 0 : index
    %5 = vector.load %arg4[%c0_4, %c0_5] : memref<128x128xf32, #tpu.memory_space<vmem>>, vector<128x128xf32>
    %cst = arith.constant dense<0.000000e+00> : vector<16x128xf32>
    %6 = tpu.matmul %4, %5, %cst {dimension_numbers = #tpu.dot_dimension_numbers<[1], [0], [0], [1], [0, 0, 1, 1], [], []>} : vector<16x128xf32>, vector<128x128xf32>, vector<16x128xf32> -> vector<16x128xf32>
    %7 = arith.addf %3, %6 : vector<16x128xf32>
    %c0_6 = arith.constant 0 : index
    %c0_7 = arith.constant 0 : index
    %8 = vector.load %arg9[%c0_6, %c0_7] : memref<16x128xf32, #tpu.memory_space<vmem>>, vector<16x128xf32>
    tpu.vector_store %arg9[%c0_6, %c0_7], %7 {strides = array<i32>} : memref<16x128xf32, #tpu.memory_space<vmem>>, vector<16x128xf32>,
    %c0_i32_8 = arith.constant 0 : i32
    %9 = arith.cmpi eq, %arg2, %c0_i32_8 : i32
    %10 = arith.extui %9 : i1 to i32
    %c0_i32_9 = arith.constant 0 : i32
    %11 = arith.cmpi ne, %10, %c0_i32_9 : i32
    scf.if %11 {
      %c0_10 = arith.constant 0 : index
      %c0_11 = arith.constant 0 : index
      %12 = vector.load %arg6[%c0_10, %c0_11] : memref<16x128xf32, #tpu.memory_space<vmem>>, vector<16x128xf32>
      %c0_12 = arith.constant 0 : index
      %c0_13 = arith.constant 0 : index
      %13 = vector.load %arg7[%c0_12, %c0_13] : memref<128x128xf32, #tpu.memory_space<vmem>>, vector<128x128xf32>
      %cst_14 = arith.constant dense<0.000000e+00> : vector<16x128xf32>
      %14 = tpu.matmul %12, %13, %cst_14 {dimension_numbers = #tpu.dot_dimension_numbers<[1], [0], [0], [1], [0, 0, 1, 1], [], []>} : vector<16x128xf32>, vector<128x128xf32>, vector<16x128xf32> -> vector<16x128xf32>
      %c0_15 = arith.constant 0 : index
      %c0_16 = arith.constant 0 : index
      %15 = vector.load %arg9[%c0_15, %c0_16] : memref<16x128xf32, #tpu.memory_space<vmem>>, vector<16x128xf32>
      %16 = arith.addf %15, %14 : vector<16x128xf32>
      %c0_17 = arith.constant 0 : index
      %c0_18 = arith.constant 0 : index
      %17 = vector.load %arg5[%c0_17, %c0_18] : memref<1x128xf32, #tpu.memory_space<vmem>>, vector<1x128xf32>
      %18 = vector.broadcast %17 : vector<1x128xf32> to vector<16x128xf32>
      %19 = arith.addf %16, %18 : vector<16x128xf32>
      %c0_19 = arith.constant 0 : index
      %c0_20 = arith.constant 0 : index
      %20 = vector.load %arg8[%c0_19, %c0_20] : memref<16x128xf32, #tpu.memory_space<vmem>>, vector<16x128xf32>
      tpu.vector_store %arg8[%c0_19, %c0_20], %19 {strides = array<i32>} : memref<16x128xf32, #tpu.memory_space<vmem>>, vector<16x128xf32>,
    } else {
    }
    return
  }
  func.func @transform_0(%arg0: i32, %arg1: i32, %arg2: i32) -> (i32, i32) {
    %c0_i32 = arith.constant 0 : i32
    return %arg0, %arg2 : i32, i32
  }
  func.func @transform_1(%arg0: i32, %arg1: i32, %arg2: i32) -> (i32, i32) {
    %c0_i32 = arith.constant 0 : i32
    return %arg2, %arg1 : i32, i32
  }
  func.func @transform_2(%arg0: i32, %arg1: i32, %arg2: i32) -> (i32, i32) {
    %c0_i32 = arith.constant 0 : i32
    %c0_i32_0 = arith.constant 0 : i32
    return %c0_i32, %arg1 : i32, i32
  }
  func.func @transform_3(%arg0: i32, %arg1: i32, %arg2: i32) -> (i32, i32) {
    %c0_i32 = arith.constant 0 : i32
    %c0_i32_0 = arith.constant 0 : i32
    return %arg0, %c0_i32 : i32, i32
  }
  func.func @transform_4(%arg0: i32, %arg1: i32, %arg2: i32) -> (i32, i32) {
    %c0_i32 = arith.constant 0 : i32
    %c0_i32_0 = arith.constant 0 : i32
    return %c0_i32, %arg1 : i32, i32
  }
  func.func @transform_5(%arg0: i32, %arg1: i32, %arg2: i32) -> (i32, i32) {
    %c0_i32 = arith.constant 0 : i32
    return %arg0, %arg1 : i32, i32
  }
}

</mosaic_0001>

<llo_original>
// kernel: tpu_custom_call.1
$region0: #{tpu_custom_call.1}
  #allocation0 [shape = 'u32[]', space=smem, size = 0x4, offset = 0x4, fixed_abs, tag = 'smem constant byte address 0x4 - core index']
  #allocation1 [shape = 'u32[144,128]{1,0:T(1,128)}', space=vmem, size = 0x12000, scoped, tag = 'internal scratch']
  #allocation2 [shape = 'f32[16,128]{1,0:T(8,128)}', space=vmem, size = 0x2000, scoped, tag = 'scratch operand']
  %s0 = inlined_call_operand.hbm [shape: f32[16,128], index: 0, kind: input, shape index: {}]
  %s1 = inlined_call_operand.hbm [shape: f32[128,128], index: 1, kind: input, shape index: {}]
  %s2 = inlined_call_operand.vmem [shape: f32[1,128], index: 2, kind: input, shape index: {}]
  %s3 = inlined_call_operand.hbm [shape: f32[16,128], index: 3, kind: input, shape index: {}]
  %s4 = inlined_call_operand.hbm [shape: f32[128,128], index: 4, kind: input, shape index: {}]
  %s5 = inlined_call_operand.hbm [shape: f32[16,128], index: 5, kind: output, shape index: {}]
  %s6 = sld [smem:[#allocation0]]
  $region54: #{tpu_custom_call.1} parent=0
    _
  %s8 = ssub.s32 1, %s6
  %s9 = scalar_select 0, %s8, %s6
  $region1: #{tpu_custom_call.1} parent=0
    #allocation3 [shape = 'u8[8192]{0}', space=vmem, size = 0x2000, scoped, tag = 'input window, operand 0, single buffered']
    #allocation4 [shape = 's32[1]{0}', space=sflag, size = 0x4, scoped, tag = 'scoped memory for tpu_custom_call.1']
    #allocation5 [shape = 's32[1]{0}', space=sflag, size = 0x4, scoped, tag = 'scoped memory for tpu_custom_call.1']
    #allocation6 [shape = 'u8[65536]{0}', space=vmem, size = 0x10000, scoped, tag = 'input window, operand 1, single buffered']
    #allocation7 [shape = 's32[1]{0}', space=sflag, size = 0x4, scoped, tag = 'scoped memory for tpu_custom_call.1']
    #allocation8 [shape = 'u8[8192]{0}', space=vmem, size = 0x2000, scoped, tag = 'input window, operand 3, single buffered']
    #allocation9 [shape = 'u8[65536]{0}', space=vmem, size = 0x10000, scoped, tag = 'input window, operand 4, single buffered']
    #allocation10 [shape = 's32[1]{0}', space=sflag, size = 0x4, scoped, tag = 'scoped memory for tpu_custom_call.1']
    #allocation11 [shape = 'u8[8192]{0}', space=vmem, size = 0x2000, scoped, tag = 'output window, operand 0, single buffered']
    %10 = vsyncpa [#allocation4], 0
    %11 = vsyncpa [#allocation7], 0
    %12 = vsyncpa [#allocation10], 0
    %13 = vsyncpa [#allocation5], 0
    // Predicated region
    $region2: #{tpu_custom_call.1} parent=1 // pred_check
      _
    $region3: #{tpu_custom_call.1} parent=1 // pred_check_branch
      %15 = sbr.rel (0) target = $region5
    $region4: #{tpu_custom_call.1} parent=1 // pred_region
      %s17 = ssub.s32 256, 256
      %18 = vsyncadd [#allocation4], %s17
      %s19 = sshll.u32 [#allocation3], 4
      %s20 = int_to_ptr.vmem [resolvable:$true] %s19
      %25 = dma.hbm_to_vmem [thread:$0]  %s0, 256, %s20, [#allocation4], 128, 128, 8
    $region5: #{tpu_custom_call.1} parent=1 // pred_fallthru
      _
    // Predicated region
    $region6: #{tpu_custom_call.1} parent=1 // pred_check
      _
    $region7: #{tpu_custom_call.1} parent=1 // pred_check_branch
      %27 = sbr.rel (0) target = $region9
    $region8: #{tpu_custom_call.1} parent=1 // pred_region
      %s29 = ssub.s32 2048, 2048
      %30 = vsyncadd [#allocation7], %s29
      %s31 = sshll.u32 [#allocation6], 4
      %s32 = int_to_ptr.vmem [resolvable:$true] %s31
      %37 = dma.hbm_to_vmem [thread:$0]  %s1, 2048, %s32, [#allocation7], 128, 128, 8
    $region9: #{tpu_custom_call.1} parent=1 // pred_fallthru
      _
    // Predicated region
    $region10: #{tpu_custom_call.1} parent=1 // pred_check
      _
    $region11: #{tpu_custom_call.1} parent=1 // pred_check_branch
      %39 = sbr.rel (0) target = $region13
    $region12: #{tpu_custom_call.1} parent=1 // pred_region
      _
    $region13: #{tpu_custom_call.1} parent=1 // pred_fallthru
      _
    // Predicated region
    $region14: #{tpu_custom_call.1} parent=1 // pred_check
      _
    $region15: #{tpu_custom_call.1} parent=1 // pred_check_branch
      %41 = sbr.rel (0) target = $region17
    $region16: #{tpu_custom_call.1} parent=1 // pred_region
      %s43 = ssub.s32 256, 256
      %44 = vsyncadd [#allocation7], %s43
      %s45 = sshll.u32 [#allocation8], 4
      %s46 = int_to_ptr.vmem [resolvable:$true] %s45
      %51 = dma.hbm_to_vmem [thread:$0]  %s3, 256, %s46, [#allocation7], 128, 128, 8
    $region17: #{tpu_custom_call.1} parent=1 // pred_fallthru
      _
    // Predicated region
    $region18: #{tpu_custom_call.1} parent=1 // pred_check
      _
    $region19: #{tpu_custom_call.1} parent=1 // pred_check_branch
      %53 = sbr.rel (0) target = $region21
    $region20: #{tpu_custom_call.1} parent=1 // pred_region
      %s55 = ssub.s32 2048, 2048
      %56 = vsyncadd [#allocation10], %s55
      %s57 = sshll.u32 [#allocation9], 4
      %s58 = int_to_ptr.vmem [resolvable:$true] %s57
      %63 = dma.hbm_to_vmem [thread:$0]  %s4, 2048, %s58, [#allocation10], 128, 128, 8
    $region21: #{tpu_custom_call.1} parent=1 // pred_fallthru
      _
    // Predicated region
    $region22: #{tpu_custom_call.1} parent=1 // pred_check
      _
    $region23: #{tpu_custom_call.1} parent=1 // pred_check_branch
      %65 = sbr.rel (0) target = $region25
    $region24: #{tpu_custom_call.1} parent=1 // pred_region
      %66 = dma.done [#allocation4], 256
    $region25: #{tpu_custom_call.1} parent=1 // pred_fallthru
      _
    // Predicated region
    $region26: #{tpu_custom_call.1} parent=1 // pred_check
      _
    $region27: #{tpu_custom_call.1} parent=1 // pred_check_branch
      %68 = sbr.rel (0) target = $region29
    $region28: #{tpu_custom_call.1} parent=1 // pred_region
      %69 = dma.done [#allocation7], 2048
    $region29: #{tpu_custom_call.1} parent=1 // pred_fallthru
      _
    // Predicated region
    $region30: #{tpu_custom_call.1} parent=1 // pred_check
      _
    $region31: #{tpu_custom_call.1} parent=1 // pred_check_branch
      %71 = sbr.rel (0) target = $region33
    $region32: #{tpu_custom_call.1} parent=1 // pred_region
      %72 = dma.done [#allocation7], 256
    $region33: #{tpu_custom_call.1} parent=1 // pred_fallthru
      _
    // Predicated region
    $region34: #{tpu_custom_call.1} parent=1 // pred_check
      _
    $region35: #{tpu_custom_call.1} parent=1 // pred_check_branch
      %74 = sbr.rel (0) target = $region37
    $region36: #{tpu_custom_call.1} parent=1 // pred_region
      %75 = dma.done [#allocation10], 2048
    $region37: #{tpu_custom_call.1} parent=1 // pred_fallthru
      _
    %p76 = scmp.eq.s32.totalorder 0, 0
    // Predicated region
    $region38: #{tpu_custom_call.1} parent=1 // pred_check
      %p77 = pneg %p76
    $region39: #{tpu_custom_call.1} parent=1 // pred_check_branch
      %79 = sbr.rel (%p77) target = $region41
    $region40: #{tpu_custom_call.1} parent=1 // pred_region
      %80 = vst [vmem:[#allocation2] sm:$0xff] 0.0
      %81 = vst [vmem:[#allocation2 + $0x8] sm:$0xff] 0.0
    $region41: #{tpu_custom_call.1} parent=1 // pred_fallthru
      _
    %v82 = vld [vmem:[#allocation2] sm:$0xff]
    %v83 = vld [vmem:[#allocation2 + $0x8] sm:$0xff]
    %v84 = vld [vmem:[#allocation3] sm:$0xff]
    %v85 = vld [vmem:[#allocation3 + $0x8] sm:$0xff]
    %v86 = vld [vmem:[#allocation6] sm:$0xff]
    %v87 = vld [vmem:[#allocation6 + $0x8] sm:$0xff]
    %v88 = vld [vmem:[#allocation6 + $0x10] sm:$0xff]
    %v89 = vld [vmem:[#allocation6 + $0x18] sm:$0xff]
    %v90 = vld [vmem:[#allocation6 + $0x20] sm:$0xff]
    %v91 = vld [vmem:[#allocation6 + $0x28] sm:$0xff]
    %v92 = vld [vmem:[#allocation6 + $0x30] sm:$0xff]
    %v93 = vld [vmem:[#allocation6 + $0x38] sm:$0xff]
    %v94 = vld [vmem:[#allocation6 + $0x40] sm:$0xff]
    %v95 = vld [vmem:[#allocation6 + $0x48] sm:$0xff]
    %v96 = vld [vmem:[#allocation6 + $0x50] sm:$0xff]
    %v97 = vld [vmem:[#allocation6 + $0x58] sm:$0xff]
    %v98 = vld [vmem:[#allocation6 + $0x60] sm:$0xff]
    %v99 = vld [vmem:[#allocation6 + $0x68] sm:$0xff]
    %v100 = vld [vmem:[#allocation6 + $0x70] sm:$0xff]
    %v101 = vld [vmem:[#allocation6 + $0x78] sm:$0xff]
    %102 = vmatprep.subr.mxu0 0.0
    %103 = vmatpush1.msra.mxu0 %v86
    %104 = vmatprep.subr.mxu0 0.0
    %105 = vmatpush1.msra.mxu0 %v87
    %106 = vmatprep.subr.mxu0 0.0
    %107 = vmatpush1.msra.mxu0 %v88
    %108 = vmatprep.subr.mxu0 0.0
    %109 = vmatpush1.msra.mxu0 %v89
    %110 = vmatprep.subr.mxu0 0.0
    %111 = vmatpush1.msra.mxu0 %v90
    %112 = vmatprep.subr.mxu0 0.0
    %113 = vmatpush1.msra.mxu0 %v91
    %114 = vmatprep.subr.mxu0 0.0
    %115 = vmatpush1.msra.mxu0 %v92
    %116 = vmatprep.subr.mxu0 0.0
    %117 = vmatpush1.msra.mxu0 %v93
    %118 = vmatprep.subr.mxu0 0.0
    %119 = vmatpush1.msra.mxu0 %v94
    %120 = vmatprep.subr.mxu0 0.0
    %121 = vmatpush1.msra.mxu0 %v95
    %122 = vmatprep.subr.mxu0 0.0
    %123 = vmatpush1.msra.mxu0 %v96
    %124 = vmatprep.subr.mxu0 0.0
    %125 = vmatpush1.msra.mxu0 %v97
    %126 = vmatprep.subr.mxu0 0.0
    %127 = vmatpush1.msra.mxu0 %v98
    %128 = vmatprep.subr.mxu0 0.0
    %129 = vmatpush1.msra.mxu0 %v99
    %130 = vmatprep.subr.mxu0 0.0
    %131 = vmatpush1.msra.mxu0 %v100
    %132 = vmatprep.subr.mxu0 0.0
    %133 = vmatpush1.msra.mxu0 %v101
    %134 = vmatprep.subr.mxu0 0.0
    %135 = vmatpush1.msra.mxu0 0.0
    %136 = vmatprep.subr.mxu0 0.0
    %137 = vmatpush1.msra.mxu0 0.0
    %138 = vmatprep.subr.mxu0 0.0
    %139 = vmatpush1.msra.mxu0 0.0
    %140 = vmatprep.subr.mxu0 0.0
    %141 = vmatpush1.msra.mxu0 0.0
    %142 = vmatprep.subr.mxu0 0.0
    %143 = vmatpush1.msra.mxu0 0.0
    %144 = vmatprep.subr.mxu0 0.0
    %145 = vmatpush1.msra.mxu0 0.0
    %146 = vmatprep.subr.mxu0 0.0
    %147 = vmatpush1.msra.mxu0 0.0
    %148 = vmatprep.subr.mxu0 0.0
    %149 = vmatpush1.msra.mxu0 0.0
    %150 = vmatprep.subr.mxu0 0.0
    %151 = vmatpush1.msra.mxu0 0.0
    %152 = vmatprep.subr.mxu0 0.0
    %153 = vmatpush1.msra.mxu0 0.0
    %154 = vmatprep.subr.mxu0 0.0
    %155 = vmatpush1.msra.mxu0 0.0
    %156 = vmatprep.subr.mxu0 0.0
    %157 = vmatpush1.msra.mxu0 0.0
    %158 = vmatprep.subr.mxu0 0.0
    %159 = vmatpush1.msra.mxu0 0.0
    %160 = vmatprep.subr.mxu0 0.0
    %161 = vmatpush1.msra.mxu0 0.0
    %162 = vmatprep.subr.mxu0 0.0
    %163 = vmatpush1.msra.mxu0 0.0
    %164 = vmatprep.subr.mxu0 0.0
    %165 = vmatpush1.msra.mxu0 0.0
    %166 = vmatprep.mubr.f32.mxu0 0.0
    %167 = vmatmul.mubr.f32.gmra.mrb[0].mxu0 %v84
    %v168 = vpop.f32.mrb[0].mxu0
    %v169 = vadd.f32 0.0, %v168
    %v170 = vpop.f32.mrb[0].mxu0
    %171 = vmatprep.mubr.f32.mxu0 0.0
    %172 = vmatmul.mubr.f32.gmra.mrb[0].mxu0 %v85
    %v173 = vpop.f32.mrb[0].mxu0
    %v174 = vadd.f32 0.0, %v173
    %v175 = vpop.f32.mrb[0].mxu0
    %176 = vdwg.mxu0
    %v177 = vadd.f32 %v82, %v169
    %v178 = vadd.f32 %v83, %v174
    %179 = vst [vmem:[#allocation2] sm:$0xff] %v177
    %180 = vst [vmem:[#allocation2 + $0x8] sm:$0xff] %v178
    // Predicated region
    $region42: #{tpu_custom_call.1} parent=1 // pred_check
      %p181 = pneg %p76
    $region43: #{tpu_custom_call.1} parent=1 // pred_check_branch
      %183 = sbr.rel (%p181) target = $region45
    $region44: #{tpu_custom_call.1} parent=1 // pred_region
      %v184 = vld [vmem:[#allocation8] sm:$0xff]
      %v185 = vld [vmem:[#allocation8 + $0x8] sm:$0xff]
      %v186 = vld [vmem:[#allocation9] sm:$0xff]
      %v187 = vld [vmem:[#allocation9 + $0x8] sm:$0xff]
      %v188 = vld [vmem:[#allocation9 + $0x10] sm:$0xff]
      %v189 = vld [vmem:[#allocation9 + $0x18] sm:$0xff]
      %v190 = vld [vmem:[#allocation9 + $0x20] sm:$0xff]
      %v191 = vld [vmem:[#allocation9 + $0x28] sm:$0xff]
      %v192 = vld [vmem:[#allocation9 + $0x30] sm:$0xff]
      %v193 = vld [vmem:[#allocation9 + $0x38] sm:$0xff]
      %v194 = vld [vmem:[#allocation9 + $0x40] sm:$0xff]
      %v195 = vld [vmem:[#allocation9 + $0x48] sm:$0xff]
      %v196 = vld [vmem:[#allocation9 + $0x50] sm:$0xff]
      %v197 = vld [vmem:[#allocation9 + $0x58] sm:$0xff]
      %v198 = vld [vmem:[#allocation9 + $0x60] sm:$0xff]
      %v199 = vld [vmem:[#allocation9 + $0x68] sm:$0xff]
      %v200 = vld [vmem:[#allocation9 + $0x70] sm:$0xff]
      %v201 = vld [vmem:[#allocation9 + $0x78] sm:$0xff]
      %202 = vmatprep.subr.mxu0 0.0
      %203 = vmatpush1.msra.mxu0 %v186
      %204 = vmatprep.subr.mxu0 0.0
      %205 = vmatpush1.msra.mxu0 %v187
      %206 = vmatprep.subr.mxu0 0.0
      %207 = vmatpush1.msra.mxu0 %v188
      %208 = vmatprep.subr.mxu0 0.0
      %209 = vmatpush1.msra.mxu0 %v189
      %210 = vmatprep.subr.mxu0 0.0
      %211 = vmatpush1.msra.mxu0 %v190
      %212 = vmatprep.subr.mxu0 0.0
      %213 = vmatpush1.msra.mxu0 %v191
      %214 = vmatprep.subr.mxu0 0.0
      %215 = vmatpush1.msra.mxu0 %v192
      %216 = vmatprep.subr.mxu0 0.0
      %217 = vmatpush1.msra.mxu0 %v193
      %218 = vmatprep.subr.mxu0 0.0
      %219 = vmatpush1.msra.mxu0 %v194
      %220 = vmatprep.subr.mxu0 0.0
      %221 = vmatpush1.msra.mxu0 %v195
      %222 = vmatprep.subr.mxu0 0.0
      %223 = vmatpush1.msra.mxu0 %v196
      %224 = vmatprep.subr.mxu0 0.0
      %225 = vmatpush1.msra.mxu0 %v197
      %226 = vmatprep.subr.mxu0 0.0
      %227 = vmatpush1.msra.mxu0 %v198
      %228 = vmatprep.subr.mxu0 0.0
      %229 = vmatpush1.msra.mxu0 %v199
      %230 = vmatprep.subr.mxu0 0.0
      %231 = vmatpush1.msra.mxu0 %v200
      %232 = vmatprep.subr.mxu0 0.0
      %233 = vmatpush1.msra.mxu0 %v201
      %234 = vmatprep.subr.mxu0 0.0
      %235 = vmatpush1.msra.mxu0 0.0
      %236 = vmatprep.subr.mxu0 0.0
      %237 = vmatpush1.msra.mxu0 0.0
      %238 = vmatprep.subr.mxu0 0.0
      %239 = vmatpush1.msra.mxu0 0.0
      %240 = vmatprep.subr.mxu0 0.0
      %241 = vmatpush1.msra.mxu0 0.0
      %242 = vmatprep.subr.mxu0 0.0
      %243 = vmatpush1.msra.mxu0 0.0
      %244 = vmatprep.subr.mxu0 0.0
      %245 = vmatpush1.msra.mxu0 0.0
      %246 = vmatprep.subr.mxu0 0.0
      %247 = vmatpush1.msra.mxu0 0.0
      %248 = vmatprep.subr.mxu0 0.0
      %249 = vmatpush1.msra.mxu0 0.0
      %250 = vmatprep.subr.mxu0 0.0
      %251 = vmatpush1.msra.mxu0 0.0
      %252 = vmatprep.subr.mxu0 0.0
      %253 = vmatpush1.msra.mxu0 0.0
      %254 = vmatprep.subr.mxu0 0.0
      %255 = vmatpush1.msra.mxu0 0.0
      %256 = vmatprep.subr.mxu0 0.0
      %257 = vmatpush1.msra.mxu0 0.0
      %258 = vmatprep.subr.mxu0 0.0
      %259 = vmatpush1.msra.mxu0 0.0
      %260 = vmatprep.subr.mxu0 0.0
      %261 = vmatpush1.msra.mxu0 0.0
      %262 = vmatprep.subr.mxu0 0.0
      %263 = vmatpush1.msra.mxu0 0.0
      %264 = vmatprep.subr.mxu0 0.0
      %265 = vmatpush1.msra.mxu0 0.0
      %266 = vmatprep.mubr.f32.mxu0 0.0
      %267 = vmatmul.mubr.f32.gmra.mrb[0].mxu0 %v184
      %v268 = vpop.f32.mrb[0].mxu0
      %v269 = vadd.f32 0.0, %v268
      %v270 = vpop.f32.mrb[0].mxu0
      %271 = vmatprep.mubr.f32.mxu0 0.0
      %272 = vmatmul.mubr.f32.gmra.mrb[0].mxu0 %v185
      %v273 = vpop.f32.mrb[0].mxu0
      %v274 = vadd.f32 0.0, %v273
      %v275 = vpop.f32.mrb[0].mxu0
      %276 = vdwg.mxu0
      %v277 = vld [vmem:[#allocation2] sm:$0xff]
      %v278 = vld [vmem:[#allocation2 + $0x8] sm:$0xff]
      %v279 = vadd.f32 %v277, %v269
      %v280 = vadd.f32 %v278, %v274
      %v281 = vld [vmem:[%s2] sm:$0x1]
      %v283 = vlaneseq
      %v284 = vshrl.u32 %v283, 7
      %v285 = vsub.s32 0, %v284
      %v286 = vrot.slane %v281, %v285
      %v288 = vadd.f32 %v279, %v286
      %v289 = vadd.f32 %v280, %v286
      %290 = vst [vmem:[#allocation11] sm:$0xff] %v288
      %291 = vst [vmem:[#allocation11 + $0x8] sm:$0xff] %v289
    $region45: #{tpu_custom_call.1} parent=1 // pred_fallthru
      _
    // Predicated region
    $region46: #{tpu_custom_call.1} parent=1 // pred_check
      _
    $region47: #{tpu_custom_call.1} parent=1 // pred_check_branch
      %293 = sbr.rel (0) target = $region49
    $region48: #{tpu_custom_call.1} parent=1 // pred_region
      %s295 = ssub.s32 256, 256
      %296 = vsyncadd [#allocation5], %s295
      %s297 = sshll.u32 [#allocation11], 4
      %s298 = int_to_ptr.vmem [resolvable:$true] %s297
      %303 = dma.vmem_to_hbm [thread:$0]  %s298, 256, %s5, [#allocation5], 128, 128, 8
    $region49: #{tpu_custom_call.1} parent=1 // pred_fallthru
      _
    // Predicated region
    $region50: #{tpu_custom_call.1} parent=1 // pred_check
      _
    $region51: #{tpu_custom_call.1} parent=1 // pred_check_branch
      %305 = sbr.rel (0) target = $region53
    $region52: #{tpu_custom_call.1} parent=1 // pred_region
      %306 = dma.done [#allocation5], 256
    $region53: #{tpu_custom_call.1} parent=1 // pred_fallthru
      _
    %307 = vsyncpa [#allocation4], 1
    %308 = vsyncpa [#allocation7], 1
    %309 = vsyncpa [#allocation10], 1
    %310 = vsyncpa [#allocation5], 1

</llo_original>
